<compile_context>
chip_gen: v7x
topology: tpu7x:2x2x1
jax: 0.10.0
libtpu: 0.0.40
codegen_flags: <defaults>
</compile_context>

<pallas_src>
import jax
import jax.numpy as jnp
from jax.experimental import pallas as pl
from jax.experimental.pallas import tpu as pltpu


def _round_up(x, m):
    return (x + m - 1) // m * m


def _cdiv(a, b):
    return (a + b - 1) // b


def _vmem_budget_bytes():
    """Usable scoped-VMEM budget = physical capacity * 7/8 (headroom).

    ~112 MiB on v5e/v6e (128 MiB), ~56 MiB on v7x (64 MiB). Falls back to a
    56 MiB budget (safe on every generation) if the info API is unavailable.
    """
    try:
        cap = int(pltpu.get_tpu_info().vmem_capacity_bytes)
    except Exception:  # pragma: no cover - older jax without get_tpu_info
        cap = 64 * 1024 * 1024
    return (cap * 7) // 8


# --------------------------------------------------------------------------- #
# Kernels
# --------------------------------------------------------------------------- #
def _ffn_resident_kernel(x_ref, w1_ref, b1_ref, w2_ref, b2_ref, o_ref):
    # Grid: (token_tiles,) ["parallel"]. Whole W1/W2 stay VMEM-resident
    # (constant index_map); one fused pass per token tile, no accumulator.
    h = jnp.dot(x_ref[...], w1_ref[...], preferred_element_type=jnp.float32)
    h = jnp.maximum(h + b1_ref[...], 0.0)            # bias + ReLU (f32)
    # Dropout: identity (nn.Dropout in eval mode).
    y = jnp.dot(h.astype(w2_ref.dtype), w2_ref[...],
                preferred_element_type=jnp.float32)
    o_ref[...] = (y + b2_ref[...]).astype(o_ref.dtype)


def _ffn_chunked_kernel(x_ref, w1_ref, b1_ref, w2_ref, b2_ref, o_ref, acc_ref):
    # Grid: (token_tiles ["parallel"], hidden_chunks ["arbitrary"/reduction]).
    # o_ref is resident across the hidden axis; acc_ref is a f32 accumulator.
    j = pl.program_id(1)

    @pl.when(j == 0)
    def _init():
        acc_ref[...] = jnp.zeros_like(acc_ref)

    h = jnp.dot(x_ref[...], w1_ref[...], preferred_element_type=jnp.float32)
    h = jnp.maximum(h + b1_ref[...], 0.0)             # bias + ReLU (f32)
    # Dropout: identity (eval mode).
    acc_ref[...] += jnp.dot(h.astype(w2_ref.dtype), w2_ref[...],
                            preferred_element_type=jnp.float32)

    @pl.when(j == pl.num_programs(1) - 1)
    def _finalize():
        o_ref[...] = (acc_ref[...] + b2_ref[...]).astype(o_ref.dtype)


# --------------------------------------------------------------------------- #
# Host-side wrapper
# --------------------------------------------------------------------------- #
def prepare_ffn_params(w1, b1, w2, b2, d_model_p, hidden_pad, compute_dtype):
    """Pad + cast FFN weights once (hoistable out of a per-step loop)."""
    d_model, hidden = w1.shape
    w1p = w1.astype(compute_dtype)
    w2p = w2.astype(compute_dtype)
    if (d_model_p, hidden_pad) != (d_model, hidden):
        w1p = jnp.pad(w1p, ((0, d_model_p - d_model), (0, hidden_pad - hidden)))
        w2p = jnp.pad(w2p, ((0, hidden_pad - hidden), (0, d_model_p - d_model)))
    b1p = b1.astype(jnp.float32)
    b2p = b2.astype(jnp.float32)
    if hidden_pad != hidden:
        b1p = jnp.pad(b1p, (0, hidden_pad - hidden))
    if d_model_p != d_model:
        b2p = jnp.pad(b2p, (0, d_model_p - d_model))
    return w1p, b1p.reshape(1, hidden_pad), w2p, b2p.reshape(1, d_model_p)


def positionwise_ffn(x, w1, b1, w2, b2, *, tm=None, th=None,
                     compute_dtype=jnp.bfloat16):
    """y = linear2(dropout(relu(linear1(x)))), dropout in eval (identity) mode.

    x : [batch, seq, d_model]
    w1: [d_model, hidden], b1: [hidden]
    w2: [hidden, d_model], b2: [d_model]
    compute_dtype: matmul operand dtype (default bf16; accumulation is f32 and
                   biases stay f32). Pass jnp.float32 for exact f32 GEMMs.
    th: force the hidden-chunked (weight-streaming) path with this chunk size.
    """
    orig_dtype = x.dtype
    batch, seq, d_model = x.shape
    hidden = w1.shape[1]
    tokens = batch * seq

    isz = jnp.dtype(compute_dtype).itemsize
    osz = jnp.dtype(orig_dtype).itemsize
    sub = {1: 32, 2: 16}.get(isz, 8)         # sublane packing granularity

    d_model_p = _round_up(d_model, 128)       # lane-dense features
    hidden_p = _round_up(hidden, 128)
    budget = _vmem_budget_bytes()

    # ---- resident-weights feasibility (2x = default double-buffering) -------
    def resident_bytes(tm_):
        return (2 * tm_ * d_model_p * isz              # x tiles
                + 2 * tm_ * d_model_p * osz            # out tiles
                + 2 * d_model_p * hidden_p * isz       # W1
                + 2 * hidden_p * d_model_p * isz       # W2
                + 2 * hidden_p * 4 + 2 * d_model_p * 4  # b1, b2 (f32)
                + tm_ * hidden_p * (4 + isz)           # h (f32) + cast copy
                + tm_ * d_model_p * 4)                 # f32 GEMM2 result

    resident_ok = (th is None) and resident_bytes(256) <= budget

    # ---- token tile ----------------------------------------------------------
    if tm is None:
        tm = 256 if resident_ok else 512   # bigger tiles when weight-streaming
    tm_eff = _round_up(max(sub, min(tm, _round_up(tokens, sub))), sub)
    # v7x megacore: make sure the "parallel" token axis has >= 2 tiles.
    if tokens <= tm_eff and tokens >= 2 * sub:
        tm_eff = _round_up(_cdiv(tokens, 2), sub)
    if resident_ok and resident_bytes(tm_eff) > budget:
        resident_ok = False                 # user-supplied tm too large

    # ---- hidden chunking -----------------------------------------------------
    if resident_ok:
        n_chunks = 1
        th_eff = hidden_p
        hidden_pad = hidden_p
        vmem_est = resident_bytes(tm_eff)
    else:
        th_req = th if th is not None else 512
        th_req = max(128, min(_round_up(th_req, 128), hidden_p))
        n_chunks = _cdiv(hidden_p, th_req)
        th_eff = _round_up(_cdiv(hidden_p, n_chunks), 128)   # balanced chunks
        hidden_pad = n_chunks * th_eff

        def chunked_bytes(tm_, th_):
            return (2 * tm_ * d_model_p * isz
                    + 2 * tm_ * d_model_p * osz
                    + 2 * d_model_p * th_ * isz
                    + 2 * th_ * d_model_p * isz
                    + 2 * th_ * 4 + 2 * d_model_p * 4
                    + tm_ * th_ * (4 + isz)            # h (f32) + cast copy
                    + tm_ * d_model_p * 4)             # f32 accumulator scratch

        # Shrink tiles until the estimate fits the per-generation budget.
        while chunked_bytes(tm_eff, th_eff) > budget and tm_eff > 2 * sub:
            tm_eff = _round_up(max(tm_eff // 2, sub), sub)
        while chunked_bytes(tm_eff, th_eff) > budget and th_eff > 256:
            n_chunks *= 2
            th_eff = _round_up(_cdiv(hidden_p, n_chunks), 128)
            hidden_pad = n_chunks * th_eff
        vmem_est = chunked_bytes(tm_eff, th_eff)

    tokens_p = _round_up(tokens, tm_eff)
    grid_tokens = tokens_p // tm_eff
    use_resident_kernel = resident_ok or n_chunks == 1

    # ---- prepare operands ----------------------------------------------------
    w1p, b1p, w2p, b2p = prepare_ffn_params(
        w1, b1, w2, b2, d_model_p, hidden_pad, compute_dtype)

    x2d = x.reshape(tokens, d_model)
    if x2d.dtype != compute_dtype:
        x2d = x2d.astype(compute_dtype)
    if (tokens_p, d_model_p) != (tokens, d_model):
        x2d = jnp.pad(x2d, ((0, tokens_p - tokens), (0, d_model_p - d_model)))

    vmem_limit = int(min(max(vmem_est * 5 // 4, 16 * 1024 * 1024), budget))

    # ---- pallas_call ---------------------------------------------------------
    if use_resident_kernel:
        grid = (grid_tokens,)
        in_specs = [
            pl.BlockSpec((tm_eff, d_model_p), lambda i: (i, 0)),     # x tile
            pl.BlockSpec((d_model_p, hidden_pad), lambda i: (0, 0)),  # W1 (resident)
            pl.BlockSpec((1, hidden_pad), lambda i: (0, 0)),          # b1
            pl.BlockSpec((hidden_pad, d_model_p), lambda i: (0, 0)),  # W2 (resident)
            pl.BlockSpec((1, d_model_p), lambda i: (0, 0)),           # b2
        ]
        out_specs = pl.BlockSpec((tm_eff, d_model_p), lambda i: (i, 0))
        scratch_shapes = []
        kernel = _ffn_resident_kernel
        dims = ("parallel",)
    else:
        grid = (grid_tokens, n_chunks)
        in_specs = [
            pl.BlockSpec((tm_eff, d_model_p), lambda i, j: (i, 0)),   # x tile
            pl.BlockSpec((d_model_p, th_eff), lambda i, j: (0, j)),   # W1 chunk
            pl.BlockSpec((1, th_eff), lambda i, j: (0, j)),           # b1 chunk
            pl.BlockSpec((th_eff, d_model_p), lambda i, j: (j, 0)),   # W2 chunk
            pl.BlockSpec((1, d_model_p), lambda i, j: (0, 0)),        # b2
        ]
        out_specs = pl.BlockSpec((tm_eff, d_model_p), lambda i, j: (i, 0))
        scratch_shapes = [pltpu.VMEM((tm_eff, d_model_p), jnp.float32)]
        kernel = _ffn_chunked_kernel
        dims = ("parallel", "arbitrary")

    out2d = pl.pallas_call(
        kernel,
        out_shape=jax.ShapeDtypeStruct((tokens_p, d_model_p), orig_dtype),
        grid_spec=pltpu.PrefetchScalarGridSpec(
            num_scalar_prefetch=0,
            grid=grid,
            in_specs=in_specs,
            out_specs=out_specs,
            scratch_shapes=scratch_shapes,
        ),
        compiler_params=pltpu.CompilerParams(
            dimension_semantics=dims,
            vmem_limit_bytes=vmem_limit,
        ),
    )(x2d, w1p, b1p, w2p, b2p)

    if (tokens_p, d_model_p) != (tokens, d_model):
        out2d = out2d[:tokens, :d_model]
    return out2d.reshape(batch, seq, d_model)


def init_params(key, d_model, hidden, dtype=jnp.float32):
    """Deterministic init mimicking nn.Linear (uniform +/- 1/sqrt(fan_in))."""
    k1, k2, k3, k4 = jax.random.split(key, 4)
    bound1 = 1.0 / (d_model ** 0.5)
    bound2 = 1.0 / (hidden ** 0.5)
    # Stored already transposed for x @ W (PyTorch keeps [out, in]).
    w1 = jax.random.uniform(k1, (d_model, hidden), dtype, -bound1, bound1)
    b1 = jax.random.uniform(k2, (hidden,), dtype, -bound1, bound1)
    w2 = jax.random.uniform(k3, (hidden, d_model), dtype, -bound2, bound2)
    b2 = jax.random.uniform(k4, (d_model,), dtype, -bound2, bound2)
    return w1, b1, w2, b2


if __name__ == "__main__":
    key = jax.random.PRNGKey(0)
    kx, kp, kx2, kp2 = jax.random.split(key, 4)

    # Case 1: small unaligned shapes (padding path), resident-weights 1-D grid.
    batch, seq, d_model, hidden = 2, 8, 32, 64
    x = jax.random.normal(kx, (batch, seq, d_model), dtype=jnp.float32)
    w1, b1, w2, b2 = init_params(kp, d_model, hidden)
    ref = jnp.maximum(x @ w1 + b1, 0.0) @ w2 + b2

    # 1a: exact f32 compute.
    out = jax.block_until_ready(
        positionwise_ffn(x, w1, b1, w2, b2, compute_dtype=jnp.float32))
    assert out.shape == (batch, seq, d_model)
    assert jnp.allclose(out, ref, atol=1e-5, rtol=1e-5)

    # 1b: default bf16 operands + f32 accumulation.
    out_bf16 = jax.block_until_ready(positionwise_ffn(x, w1, b1, w2, b2))
    assert out_bf16.shape == (batch, seq, d_model)
    assert jnp.allclose(out_bf16, ref, atol=5e-2, rtol=5e-2)

    # Case 2: lane-aligned shapes, forced hidden-chunked path (>1 hidden chunk
    # + >=2 token tiles: exercises the reduction axis and accumulator logic).
    batch2, seq2, d_model2, hidden2 = 2, 64, 128, 256
    x2 = jax.random.normal(kx2, (batch2, seq2, d_model2), dtype=jnp.float32)
    w1b, b1b, w2b, b2b = init_params(kp2, d_model2, hidden2)
    ref2 = jnp.maximum(x2 @ w1b + b1b, 0.0) @ w2b + b2b

    out2 = jax.block_until_ready(
        positionwise_ffn(x2, w1b, b1b, w2b, b2b, th=128,
                         compute_dtype=jnp.float32))
    assert out2.shape == (batch2, seq2, d_model2)
    assert jnp.allclose(out2, ref2, atol=1e-4, rtol=1e-4)

    print("KERNEL_OK")
</pallas_src>

<mosaic_0001>
module attributes {stable_mosaic.version = 11 : i64} {
  func.func @_ffn_resident_kernel(%arg0: i32, %arg1: memref<8x128xf32, #tpu.memory_space<vmem>>, %arg2: memref<128x128xf32, #tpu.memory_space<vmem>>, %arg3: memref<1x128xf32, #tpu.memory_space<vmem>>, %arg4: memref<128x128xf32, #tpu.memory_space<vmem>>, %arg5: memref<1x128xf32, #tpu.memory_space<vmem>>, %arg6: memref<8x128xf32, #tpu.memory_space<vmem>>) attributes {dimension_semantics = [#tpu.dimension_semantics<parallel>], iteration_bounds = array<i64: 2>, scalar_prefetch = 0 : i64, scratch_operands = 0 : i64, tpu.core_type = #tpu.core_type<tc>, window_params = [{transform_indices = @transform_0, window_bounds = array<i64: 8, 128>}, {pipeline_mode = #tpu.pipeline_mode<synchronous>, transform_indices = @transform_1, window_bounds = array<i64: 128, 128>}, {pipeline_mode = #tpu.pipeline_mode<synchronous>, transform_indices = @transform_2, window_bounds = array<i64: 1, 128>}, {pipeline_mode = #tpu.pipeline_mode<synchronous>, transform_indices = @transform_3, window_bounds = array<i64: 128, 128>}, {pipeline_mode = #tpu.pipeline_mode<synchronous>, transform_indices = @transform_4, window_bounds = array<i64: 1, 128>}, {transform_indices = @transform_5, window_bounds = array<i64: 8, 128>}]} {
    %c0 = arith.constant 0 : index
    %c0_0 = arith.constant 0 : index
    %0 = vector.load %arg1[%c0, %c0_0] : memref<8x128xf32, #tpu.memory_space<vmem>>, vector<8x128xf32>
    %c0_1 = arith.constant 0 : index
    %c0_2 = arith.constant 0 : index
    %1 = vector.load %arg2[%c0_1, %c0_2] : memref<128x128xf32, #tpu.memory_space<vmem>>, vector<128x128xf32>
    %cst = arith.constant dense<0.000000e+00> : vector<8x128xf32>
    %2 = tpu.matmul %0, %1, %cst {dimension_numbers = #tpu.dot_dimension_numbers<[1], [0], [0], [1], [0, 0, 1, 1], [], []>} : vector<8x128xf32>, vector<128x128xf32>, vector<8x128xf32> -> vector<8x128xf32>
    %c0_3 = arith.constant 0 : index
    %c0_4 = arith.constant 0 : index
    %3 = vector.load %arg3[%c0_3, %c0_4] : memref<1x128xf32, #tpu.memory_space<vmem>>, vector<1x128xf32>
    %4 = vector.broadcast %3 : vector<1x128xf32> to vector<8x128xf32>
    %5 = arith.addf %2, %4 : vector<8x128xf32>
    %cst_5 = arith.constant 0.000000e+00 : f32
    %6 = vector.broadcast %cst_5 : f32 to vector<8x128xf32>
    %7 = arith.maximumf %5, %6 : vector<8x128xf32>
    %c0_6 = arith.constant 0 : index
    %c0_7 = arith.constant 0 : index
    %8 = vector.load %arg4[%c0_6, %c0_7] : memref<128x128xf32, #tpu.memory_space<vmem>>, vector<128x128xf32>
    %cst_8 = arith.constant dense<0.000000e+00> : vector<8x128xf32>
    %9 = tpu.matmul %7, %8, %cst_8 {dimension_numbers = #tpu.dot_dimension_numbers<[1], [0], [0], [1], [0, 0, 1, 1], [], []>} : vector<8x128xf32>, vector<128x128xf32>, vector<8x128xf32> -> vector<8x128xf32>
    %c0_9 = arith.constant 0 : index
    %c0_10 = arith.constant 0 : index
    %10 = vector.load %arg5[%c0_9, %c0_10] : memref<1x128xf32, #tpu.memory_space<vmem>>, vector<1x128xf32>
    %11 = vector.broadcast %10 : vector<1x128xf32> to vector<8x128xf32>
    %12 = arith.addf %9, %11 : vector<8x128xf32>
    %c0_11 = arith.constant 0 : index
    %c0_12 = arith.constant 0 : index
    %13 = vector.load %arg6[%c0_11, %c0_12] : memref<8x128xf32, #tpu.memory_space<vmem>>, vector<8x128xf32>
    tpu.vector_store %arg6[%c0_11, %c0_12], %12 {strides = array<i32>} : memref<8x128xf32, #tpu.memory_space<vmem>>, vector<8x128xf32>,
    return
  }
  func.func @transform_0(%arg0: i32) -> (i32, i32) {
    %c0_i32 = arith.constant 0 : i32
    %c0_i32_0 = arith.constant 0 : i32
    return %arg0, %c0_i32 : i32, i32
  }
  func.func @transform_1(%arg0: i32) -> (i32, i32) {
    %c0_i32 = arith.constant 0 : i32
    %c0_i32_0 = arith.constant 0 : i32
    %c0_i32_1 = arith.constant 0 : i32
    return %c0_i32, %c0_i32_0 : i32, i32
  }
  func.func @transform_2(%arg0: i32) -> (i32, i32) {
    %c0_i32 = arith.constant 0 : i32
    %c0_i32_0 = arith.constant 0 : i32
    %c0_i32_1 = arith.constant 0 : i32
    return %c0_i32, %c0_i32_0 : i32, i32
  }
  func.func @transform_3(%arg0: i32) -> (i32, i32) {
    %c0_i32 = arith.constant 0 : i32
    %c0_i32_0 = arith.constant 0 : i32
    %c0_i32_1 = arith.constant 0 : i32
    return %c0_i32, %c0_i32_0 : i32, i32
  }
  func.func @transform_4(%arg0: i32) -> (i32, i32) {
    %c0_i32 = arith.constant 0 : i32
    %c0_i32_0 = arith.constant 0 : i32
    %c0_i32_1 = arith.constant 0 : i32
    return %c0_i32, %c0_i32_0 : i32, i32
  }
  func.func @transform_5(%arg0: i32) -> (i32, i32) {
    %c0_i32 = arith.constant 0 : i32
    %c0_i32_0 = arith.constant 0 : i32
    return %arg0, %c0_i32 : i32, i32
  }
}

</mosaic_0001>

<llo_original>
// kernel: tpu_custom_call.1
$region0: #{tpu_custom_call.1}
  #allocation0 [shape = 'u32[]', space=smem, size = 0x4, offset = 0x4, fixed_abs, tag = 'smem constant byte address 0x4 - core index']
  #allocation1 [shape = 'u32[144,128]{1,0:T(1,128)}', space=vmem, size = 0x12000, scoped, tag = 'internal scratch']
  %s0 = inlined_call_operand.hbm [shape: f32[16,128], index: 0, kind: input, shape index: {}]
  %s1 = inlined_call_operand.hbm [shape: f32[128,128], index: 1, kind: input, shape index: {}]
  %s2 = inlined_call_operand.vmem [shape: f32[1,128], index: 2, kind: input, shape index: {}]
  %s3 = inlined_call_operand.hbm [shape: f32[128,128], index: 3, kind: input, shape index: {}]
  %s4 = inlined_call_operand.vmem [shape: f32[1,128], index: 4, kind: input, shape index: {}]
  %s5 = inlined_call_operand.hbm [shape: f32[16,128], index: 5, kind: output, shape index: {}]
  %s6 = sld [smem:[#allocation0]]
  $region65: #{tpu_custom_call.1} parent=0
    _
  %s8 = ssub.s32 1, %s6
  %s9 = scalar_select 0, %s8, %s6
  $region1: #{tpu_custom_call.1} parent=0
    #allocation2 [shape = 'u8[8192]{0}', space=vmem, size = 0x2000, scoped, tag = 'input window, operand 0']
    #allocation3 [shape = 's32[2]{0}', space=sflag, size = 0x8, scoped, tag = 'scoped memory for tpu_custom_call.1']
    #allocation4 [shape = 's32[2]{0}', space=sflag, size = 0x8, scoped, tag = 'scoped memory for tpu_custom_call.1']
    #allocation5 [shape = 'u8[65536]{0}', space=vmem, size = 0x10000, scoped, tag = 'input window, operand 1, single buffered']
    #allocation6 [shape = 's32[1]{0}', space=sflag, size = 0x4, scoped, tag = 'scoped memory for tpu_custom_call.1']
    #allocation7 [shape = 'u8[65536]{0}', space=vmem, size = 0x10000, scoped, tag = 'input window, operand 3, single buffered']
    #allocation8 [shape = 'u8[8192]{0}', space=vmem, size = 0x2000, scoped, tag = 'output window, operand 0']
    %10 = vsyncpa [#allocation3], 0
    %s11 = scalar_lea.sflag [#allocation3], 1
    %12 = vsyncpa %s11, 0
    %13 = vsyncpa [#allocation6], 0
    %14 = vsyncpa [#allocation4], 0
    %s15 = scalar_lea.sflag [#allocation4], 1
    %16 = vsyncpa %s15, 0
    loop: start=0, step=1, limit=4
    $region2: #{tpu_custom_call.1} parent=1 // loop_pre_header
      _
    $region3: #{tpu_custom_call.1} parent=1 // loop_header
      %s18 = sphi 0, %s22
      %p19 = scmp.ge.s32.totalorder %s18, 4
      %s28 = sphi 0, %s30
      %s31 = sphi 0, %s28
      %s32 = sphi 0, %s31
      %s48 = sphi 0, %s32
      %s52 = sphi 0, %s52
      %s54 = sphi 0, %s52
      %s55 = sphi 0, %s54
      %s69 = sphi 0, %s55
      %s73 = sphi 0, %s73
      %s75 = sphi 0, %s73
      %s76 = sphi 0, %s75
      %s90 = sphi 0, %s76
      %s94 = sphi 0, %s94
      %s96 = sphi 0, %s94
      %s97 = sphi 0, %s96
      %s111 = sphi 0, %s97
      %s115 = sphi 0, %s115
      %s117 = sphi 0, %s115
      %s118 = sphi 0, %s117
      %s132 = sphi 0, %s118
      %s138 = sphi 0, %s140
      %s141 = sphi 0, %s138
      %s142 = sphi 0, %s141
      %s158 = sphi 0, %s142
    $region4: #{tpu_custom_call.1} parent=1 // loop_header_branch
      %21 = sbr.rel (%p19) target = $region8
    $region5: #{tpu_custom_call.1} parent=1 // loop_body
      %s23 = ssub.s32 %s18, 1
      %s24 = ssub.s32 %s18, 2
      %s25 = sadd.s32 %s18, 1
      %s26 = ssub.s32 %s18, %s25
      %p27 = scmp.eq.s32.totalorder %s26, 0
      %s29 = sadd.s32 %s28, 1
      %s30 = scalar_select %p27, %s28, %s29
      %p33 = pneg %p27
      %p34 = scmp.eq.s32.totalorder %s18, 1
      %p35 = por %p33, %p34
      %p36 = scmp.ne.s32.totalorder %s28, %s31
      %p37 = scmp.eq.s32.totalorder %s18, 0
      %p38 = por %p36, %p37
      %p39 = scmp.ne.s32.totalorder %s28, %s31
      %p40 = scmp.eq.s32.totalorder %s23, 1
      %p41 = por %p39, %p40
      %p42 = scmp.ne.s32.totalorder %s31, %s32
      %p43 = scmp.eq.s32.totalorder %s23, 0
      %p44 = por %p42, %p43
      %p45 = scmp.ne.s32.totalorder %s31, %s32
      %p46 = scmp.eq.s32.totalorder %s24, 1
      %p47 = por %p45, %p46
      %p49 = scmp.ne.s32.totalorder %s32, %s48
      %p50 = scmp.eq.s32.totalorder %s24, 0
      %p51 = por %p49, %p50
      %s53 = sadd.s32 %s52, 1
      %p56 = scmp.eq.s32.totalorder %s18, 1
      %p57 = scmp.ne.s32.totalorder %s52, %s54
      %p58 = scmp.eq.s32.totalorder %s18, 0
      %p59 = por %p57, %p58
      %p60 = scmp.ne.s32.totalorder %s52, %s54
      %p61 = scmp.eq.s32.totalorder %s23, 1
      %p62 = por %p60, %p61
      %p63 = scmp.ne.s32.totalorder %s54, %s55
      %p64 = scmp.eq.s32.totalorder %s23, 0
      %p65 = por %p63, %p64
      %p66 = scmp.ne.s32.totalorder %s54, %s55
      %p67 = scmp.eq.s32.totalorder %s24, 1
      %p68 = por %p66, %p67
      %p70 = scmp.ne.s32.totalorder %s55, %s69
      %p71 = scmp.eq.s32.totalorder %s24, 0
      %p72 = por %p70, %p71
      %s74 = sadd.s32 %s73, 1
      %p77 = scmp.eq.s32.totalorder %s18, 1
      %p78 = scmp.ne.s32.totalorder %s73, %s75
      %p79 = scmp.eq.s32.totalorder %s18, 0
      %p80 = por %p78, %p79
      %p81 = scmp.ne.s32.totalorder %s73, %s75
      %p82 = scmp.eq.s32.totalorder %s23, 1
      %p83 = por %p81, %p82
      %p84 = scmp.ne.s32.totalorder %s75, %s76
      %p85 = scmp.eq.s32.totalorder %s23, 0
      %p86 = por %p84, %p85
      %p87 = scmp.ne.s32.totalorder %s75, %s76
      %p88 = scmp.eq.s32.totalorder %s24, 1
      %p89 = por %p87, %p88
      %p91 = scmp.ne.s32.totalorder %s76, %s90
      %p92 = scmp.eq.s32.totalorder %s24, 0
      %p93 = por %p91, %p92
      %s95 = sadd.s32 %s94, 1
      %p98 = scmp.eq.s32.totalorder %s18, 1
      %p99 = scmp.ne.s32.totalorder %s94, %s96
      %p100 = scmp.eq.s32.totalorder %s18, 0
      %p101 = por %p99, %p100
      %p102 = scmp.ne.s32.totalorder %s94, %s96
      %p103 = scmp.eq.s32.totalorder %s23, 1
      %p104 = por %p102, %p103
      %p105 = scmp.ne.s32.totalorder %s96, %s97
      %p106 = scmp.eq.s32.totalorder %s23, 0
      %p107 = por %p105, %p106
      %p108 = scmp.ne.s32.totalorder %s96, %s97
      %p109 = scmp.eq.s32.totalorder %s24, 1
      %p110 = por %p108, %p109
      %p112 = scmp.ne.s32.totalorder %s97, %s111
      %p113 = scmp.eq.s32.totalorder %s24, 0
      %p114 = por %p112, %p113
      %s116 = sadd.s32 %s115, 1
      %p119 = scmp.eq.s32.totalorder %s18, 1
      %p120 = scmp.ne.s32.totalorder %s115, %s117
      %p121 = scmp.eq.s32.totalorder %s18, 0
      %p122 = por %p120, %p121
      %p123 = scmp.ne.s32.totalorder %s115, %s117
      %p124 = scmp.eq.s32.totalorder %s23, 1
      %p125 = por %p123, %p124
      %p126 = scmp.ne.s32.totalorder %s117, %s118
      %p127 = scmp.eq.s32.totalorder %s23, 0
      %p128 = por %p126, %p127
      %p129 = scmp.ne.s32.totalorder %s117, %s118
      %p130 = scmp.eq.s32.totalorder %s24, 1
      %p131 = por %p129, %p130
      %p133 = scmp.ne.s32.totalorder %s118, %s132
      %p134 = scmp.eq.s32.totalorder %s24, 0
      %p135 = por %p133, %p134
      %s136 = ssub.s32 %s18, %s25
      %p137 = scmp.eq.s32.totalorder %s136, 0
      %s139 = sadd.s32 %s138, 1
      %s140 = scalar_select %p137, %s138, %s139
      %p143 = pneg %p137
      %p144 = scmp.eq.s32.totalorder %s18, 1
      %p145 = por %p143, %p144
      %p146 = scmp.ne.s32.totalorder %s138, %s141
      %p147 = scmp.eq.s32.totalorder %s18, 0
      %p148 = por %p146, %p147
      %p149 = scmp.ne.s32.totalorder %s138, %s141
      %p150 = scmp.eq.s32.totalorder %s23, 1
      %p151 = por %p149, %p150
      %p152 = scmp.ne.s32.totalorder %s141, %s142
      %p153 = scmp.eq.s32.totalorder %s23, 0
      %p154 = por %p152, %p153
      %p155 = scmp.ne.s32.totalorder %s141, %s142
      %p156 = scmp.eq.s32.totalorder %s24, 1
      %p157 = por %p155, %p156
      %p159 = scmp.ne.s32.totalorder %s142, %s158
      %p160 = scmp.eq.s32.totalorder %s24, 0
      %p161 = por %p159, %p160
      %p162 = scmp.le.s32.totalorder 1, %s18
      %p163 = scmp.lt.s32.totalorder %s18, 3
      %p164 = pnand %p162, %p163
      %p165 = pneg %p164
      // Predicated region
      $region9: #{tpu_custom_call.1} parent=5 // pred_check
        _
      $region10: #{tpu_custom_call.1} parent=5 // pred_check_branch
        %167 = sbr.rel (%p164) target = $region12
      $region11: #{tpu_custom_call.1} parent=5 // pred_region
        %s168 = ssub.s32 %s18, 1
        // Predicated region
        $region13: #{tpu_custom_call.1} parent=11 // pred_check
          %p169 = pneg %p65
        $region14: #{tpu_custom_call.1} parent=11 // pred_check_branch
          %171 = sbr.rel (%p169) target = $region16
        $region15: #{tpu_custom_call.1} parent=11 // pred_region
          %s173 = ssub.s32 2048, 2048
          %174 = vsyncadd [#allocation6], %s173
          %s175 = sshll.u32 [#allocation5], 4
          %s176 = int_to_ptr.vmem [resolvable:$true] %s175
          %181 = dma.hbm_to_vmem [thread:$0]  %s1, 2048, %s176, [#allocation6], 128, 128, 8
        $region16: #{tpu_custom_call.1} parent=11 // pred_fallthru
          _
        // Predicated region
        $region17: #{tpu_custom_call.1} parent=11 // pred_check
          %p182 = pneg %p86
        $region18: #{tpu_custom_call.1} parent=11 // pred_check_branch
          %184 = sbr.rel (%p182) target = $region20
        $region19: #{tpu_custom_call.1} parent=11 // pred_region
          _
        $region20: #{tpu_custom_call.1} parent=11 // pred_fallthru
          _
        // Predicated region
        $region21: #{tpu_custom_call.1} parent=11 // pred_check
          %p185 = pneg %p107
        $region22: #{tpu_custom_call.1} parent=11 // pred_check_branch
          %187 = sbr.rel (%p185) target = $region24
        $region23: #{tpu_custom_call.1} parent=11 // pred_region
          %s189 = ssub.s32 2048, 2048
          %190 = vsyncadd [#allocation6], %s189
          %s191 = sshll.u32 [#allocation7], 4
          %s192 = int_to_ptr.vmem [resolvable:$true] %s191
          %197 = dma.hbm_to_vmem [thread:$0]  %s3, 2048, %s192, [#allocation6], 128, 128, 8
        $region24: #{tpu_custom_call.1} parent=11 // pred_fallthru
          _
        // Predicated region
        $region25: #{tpu_custom_call.1} parent=11 // pred_check
          %p198 = pneg %p128
        $region26: #{tpu_custom_call.1} parent=11 // pred_check_branch
          %200 = sbr.rel (%p198) target = $region28
        $region27: #{tpu_custom_call.1} parent=11 // pred_region
          _
        $region28: #{tpu_custom_call.1} parent=11 // pred_fallthru
          _
      $region12: #{tpu_custom_call.1} parent=5 // pred_fallthru
        _
      %p201 = scmp.lt.s32.totalorder %s18, 2
      // Predicated region
      $region29: #{tpu_custom_call.1} parent=5 // pred_check
        %p202 = pneg %p201
      $region30: #{tpu_custom_call.1} parent=5 // pred_check_branch
        %204 = sbr.rel (%p202) target = $region32
      $region31: #{tpu_custom_call.1} parent=5 // pred_region
        // Predicated region
        $region33: #{tpu_custom_call.1} parent=31 // pred_check
          %p205 = pneg %p38
        $region34: #{tpu_custom_call.1} parent=31 // pred_check_branch
          %207 = sbr.rel (%p205) target = $region36
        $region35: #{tpu_custom_call.1} parent=31 // pred_region
          %s208 = sand.u32 %s28, 1
          %s209 = scalar_lea.sflag [#allocation3], %s208
          %s210 = sand.u32 %s28, 1
          %s211 = smul.addr %s210, 8
          %s212 = scalar_lea.vmem [#allocation2], %s211
          %s214 = ssub.s32 128, 128
          %215 = vsyncadd %s209, %s214
          %s216 = smul.addr %s18, 128
          %s217 = scalar_lea.hbm %s0, %s216
          %s219 = sshll.u32 %s212, 4
          %s220 = int_to_ptr.vmem [resolvable:$true] %s219
          %222 = dma.hbm_to_vmem [thread:$0]  %s217, 128, %s220, %s209
        $region36: #{tpu_custom_call.1} parent=31 // pred_fallthru
          _
      $region32: #{tpu_custom_call.1} parent=5 // pred_fallthru
        _
      %p223 = scmp.le.s32.totalorder 1, %s18
      %p224 = scmp.lt.s32.totalorder %s18, 3
      %p225 = pnand %p223, %p224
      %p226 = pneg %p225
      // Predicated region
      $region37: #{tpu_custom_call.1} parent=5 // pred_check
        _
      $region38: #{tpu_custom_call.1} parent=5 // pred_check_branch
        %228 = sbr.rel (%p225) target = $region40
      $region39: #{tpu_custom_call.1} parent=5 // pred_region
        %s229 = ssub.s32 %s18, 1
        %s230 = sand.u32 %s31, 1
        %s231 = scalar_lea.sflag [#allocation3], %s230
        %s232 = sand.u32 %s31, 1
        %s233 = smul.addr %s232, 8
        %s234 = scalar_lea.vmem [#allocation2], %s233
        // Predicated region
        $region41: #{tpu_custom_call.1} parent=39 // pred_check
          %p235 = pneg %p44
        $region42: #{tpu_custom_call.1} parent=39 // pred_check_branch
          %237 = sbr.rel (%p235) target = $region44
        $region43: #{tpu_custom_call.1} parent=39 // pred_region
          %238 = dma.done %s231, 128
        $region44: #{tpu_custom_call.1} parent=39 // pred_fallthru
          _
        // Predicated region
        $region45: #{tpu_custom_call.1} parent=39 // pred_check
          %p239 = pneg %p65
        $region46: #{tpu_custom_call.1} parent=39 // pred_check_branch
          %241 = sbr.rel (%p239) target = $region48
        $region47: #{tpu_custom_call.1} parent=39 // pred_region
          %242 = dma.done [#allocation6], 2048
        $region48: #{tpu_custom_call.1} parent=39 // pred_fallthru
          _
        // Predicated region
        $region49: #{tpu_custom_call.1} parent=39 // pred_check
          %p243 = pneg %p107
        $region50: #{tpu_custom_call.1} parent=39 // pred_check_branch
          %245 = sbr.rel (%p243) target = $region52
        $region51: #{tpu_custom_call.1} parent=39 // pred_region
          %246 = dma.done [#allocation6], 2048
        $region52: #{tpu_custom_call.1} parent=39 // pred_fallthru
          _
        %s247 = sand.u32 %s31, 1
        %s248 = scalar_lea.sflag [#allocation3], %s247
        %s249 = sand.u32 %s31, 1
        %s250 = smul.addr %s249, 8
        %s251 = scalar_lea.vmem [#allocation2], %s250
        %p252 = pneg %p44
        %p253 = pneg %p41
        %p254 = pneg %p65
        %p255 = pneg %p62
        %p256 = pneg %p86
        %p257 = pneg %p83
        %p258 = pneg %p107
        %p259 = pneg %p104
        %p260 = pneg %p128
        %p261 = pneg %p125
        %p262 = pneg %p154
        %p263 = pneg %p151
        %s264 = sand.u32 %s141, 1
        %s265 = scalar_lea.sflag [#allocation4], %s264
        %s266 = sand.u32 %s141, 1
        %s267 = smul.addr %s266, 8
        %s268 = scalar_lea.vmem [#allocation8], %s267
        %v269 = vld [vmem:[%s234] sm:$0xff]
        %v270 = vld [vmem:[#allocation5] sm:$0xff]
        %v271 = vld [vmem:[#allocation5 + $0x8] sm:$0xff]
        %v272 = vld [vmem:[#allocation5 + $0x10] sm:$0xff]
        %v273 = vld [vmem:[#allocation5 + $0x18] sm:$0xff]
        %v274 = vld [vmem:[#allocation5 + $0x20] sm:$0xff]
        %v275 = vld [vmem:[#allocation5 + $0x28] sm:$0xff]
        %v276 = vld [vmem:[#allocation5 + $0x30] sm:$0xff]
        %v277 = vld [vmem:[#allocation5 + $0x38] sm:$0xff]
        %v278 = vld [vmem:[#allocation5 + $0x40] sm:$0xff]
        %v279 = vld [vmem:[#allocation5 + $0x48] sm:$0xff]
        %v280 = vld [vmem:[#allocation5 + $0x50] sm:$0xff]
        %v281 = vld [vmem:[#allocation5 + $0x58] sm:$0xff]
        %v282 = vld [vmem:[#allocation5 + $0x60] sm:$0xff]
        %v283 = vld [vmem:[#allocation5 + $0x68] sm:$0xff]
        %v284 = vld [vmem:[#allocation5 + $0x70] sm:$0xff]
        %v285 = vld [vmem:[#allocation5 + $0x78] sm:$0xff]
        %v286 = vld [vmem:[%s2] sm:$0x1]
        %v288 = vlaneseq
        %v289 = vshrl.u32 %v288, 7
        %v290 = vsub.s32 0, %v289
        %v291 = vrot.slane %v286, %v290
        %293 = vmatprep.subr.mxu0 0.0
        %294 = vmatpush1.msra.mxu0 %v270
        %295 = vmatprep.subr.mxu0 0.0
        %296 = vmatpush1.msra.mxu0 %v271
        %297 = vmatprep.subr.mxu0 0.0
        %298 = vmatpush1.msra.mxu0 %v272
        %299 = vmatprep.subr.mxu0 0.0
        %300 = vmatpush1.msra.mxu0 %v273
        %301 = vmatprep.subr.mxu0 0.0
        %302 = vmatpush1.msra.mxu0 %v274
        %303 = vmatprep.subr.mxu0 0.0
        %304 = vmatpush1.msra.mxu0 %v275
        %305 = vmatprep.subr.mxu0 0.0
        %306 = vmatpush1.msra.mxu0 %v276
        %307 = vmatprep.subr.mxu0 0.0
        %308 = vmatpush1.msra.mxu0 %v277
        %309 = vmatprep.subr.mxu0 0.0
        %310 = vmatpush1.msra.mxu0 %v278
        %311 = vmatprep.subr.mxu0 0.0
        %312 = vmatpush1.msra.mxu0 %v279
        %313 = vmatprep.subr.mxu0 0.0
        %314 = vmatpush1.msra.mxu0 %v280
        %315 = vmatprep.subr.mxu0 0.0
        %316 = vmatpush1.msra.mxu0 %v281
        %317 = vmatprep.subr.mxu0 0.0
        %318 = vmatpush1.msra.mxu0 %v282
        %319 = vmatprep.subr.mxu0 0.0
        %320 = vmatpush1.msra.mxu0 %v283
        %321 = vmatprep.subr.mxu0 0.0
        %322 = vmatpush1.msra.mxu0 %v284
        %323 = vmatprep.subr.mxu0 0.0
        %324 = vmatpush1.msra.mxu0 %v285
        %325 = vmatprep.subr.mxu0 0.0
        %326 = vmatpush1.msra.mxu0 0.0
        %327 = vmatprep.subr.mxu0 0.0
        %328 = vmatpush1.msra.mxu0 0.0
        %329 = vmatprep.subr.mxu0 0.0
        %330 = vmatpush1.msra.mxu0 0.0
        %331 = vmatprep.subr.mxu0 0.0
        %332 = vmatpush1.msra.mxu0 0.0
        %333 = vmatprep.subr.mxu0 0.0
        %334 = vmatpush1.msra.mxu0 0.0
        %335 = vmatprep.subr.mxu0 0.0
        %336 = vmatpush1.msra.mxu0 0.0
        %337 = vmatprep.subr.mxu0 0.0
        %338 = vmatpush1.msra.mxu0 0.0
        %339 = vmatprep.subr.mxu0 0.0
        %340 = vmatpush1.msra.mxu0 0.0
        %341 = vmatprep.subr.mxu0 0.0
        %342 = vmatpush1.msra.mxu0 0.0
        %343 = vmatprep.subr.mxu0 0.0
        %344 = vmatpush1.msra.mxu0 0.0
        %345 = vmatprep.subr.mxu0 0.0
        %346 = vmatpush1.msra.mxu0 0.0
        %347 = vmatprep.subr.mxu0 0.0
        %348 = vmatpush1.msra.mxu0 0.0
        %349 = vmatprep.subr.mxu0 0.0
        %350 = vmatpush1.msra.mxu0 0.0
        %351 = vmatprep.subr.mxu0 0.0
        %352 = vmatpush1.msra.mxu0 0.0
        %353 = vmatprep.subr.mxu0 0.0
        %354 = vmatpush1.msra.mxu0 0.0
        %355 = vmatprep.subr.mxu0 0.0
        %356 = vmatpush1.msra.mxu0 0.0
        %357 = vmatprep.mubr.f32.mxu0 0.0
        %358 = vmatmul.mubr.f32.gmra.mrb[0].mxu0 %v269
        %v359 = vpop.f32.mrb[0].mxu0
        %v360 = vadd.f32 %v291, %v359
        %v361 = vpop.f32.mrb[0].mxu0
        %362 = vdwg.mxu0
        %v363 = vmax.f32 %v360, 0.0
        %v364 = vld [vmem:[#allocation7] sm:$0xff]
        %v365 = vld [vmem:[#allocation7 + $0x8] sm:$0xff]
        %v366 = vld [vmem:[#allocation7 + $0x10] sm:$0xff]
        %v367 = vld [vmem:[#allocation7 + $0x18] sm:$0xff]
        %v368 = vld [vmem:[#allocation7 + $0x20] sm:$0xff]
        %v369 = vld [vmem:[#allocation7 + $0x28] sm:$0xff]
        %v370 = vld [vmem:[#allocation7 + $0x30] sm:$0xff]
        %v371 = vld [vmem:[#allocation7 + $0x38] sm:$0xff]
        %v372 = vld [vmem:[#allocation7 + $0x40] sm:$0xff]
        %v373 = vld [vmem:[#allocation7 + $0x48] sm:$0xff]
        %v374 = vld [vmem:[#allocation7 + $0x50] sm:$0xff]
        %v375 = vld [vmem:[#allocation7 + $0x58] sm:$0xff]
        %v376 = vld [vmem:[#allocation7 + $0x60] sm:$0xff]
        %v377 = vld [vmem:[#allocation7 + $0x68] sm:$0xff]
        %v378 = vld [vmem:[#allocation7 + $0x70] sm:$0xff]
        %v379 = vld [vmem:[#allocation7 + $0x78] sm:$0xff]
        %v380 = vld [vmem:[%s4] sm:$0x1]
        %v382 = vlaneseq
        %v383 = vshrl.u32 %v382, 7
        %v384 = vsub.s32 0, %v383
        %v385 = vrot.slane %v380, %v384
        %387 = vmatprep.subr.mxu0 0.0
        %388 = vmatpush1.msra.mxu0 %v364
        %389 = vmatprep.subr.mxu0 0.0
        %390 = vmatpush1.msra.mxu0 %v365
        %391 = vmatprep.subr.mxu0 0.0
        %392 = vmatpush1.msra.mxu0 %v366
        %393 = vmatprep.subr.mxu0 0.0
        %394 = vmatpush1.msra.mxu0 %v367
        %395 = vmatprep.subr.mxu0 0.0
        %396 = vmatpush1.msra.mxu0 %v368
        %397 = vmatprep.subr.mxu0 0.0
        %398 = vmatpush1.msra.mxu0 %v369
        %399 = vmatprep.subr.mxu0 0.0
        %400 = vmatpush1.msra.mxu0 %v370
        %401 = vmatprep.subr.mxu0 0.0
        %402 = vmatpush1.msra.mxu0 %v371
        %403 = vmatprep.subr.mxu0 0.0
        %404 = vmatpush1.msra.mxu0 %v372
        %405 = vmatprep.subr.mxu0 0.0
        %406 = vmatpush1.msra.mxu0 %v373
        %407 = vmatprep.subr.mxu0 0.0
        %408 = vmatpush1.msra.mxu0 %v374
        %409 = vmatprep.subr.mxu0 0.0
        %410 = vmatpush1.msra.mxu0 %v375
        %411 = vmatprep.subr.mxu0 0.0
        %412 = vmatpush1.msra.mxu0 %v376
        %413 = vmatprep.subr.mxu0 0.0
        %414 = vmatpush1.msra.mxu0 %v377
        %415 = vmatprep.subr.mxu0 0.0
        %416 = vmatpush1.msra.mxu0 %v378
        %417 = vmatprep.subr.mxu0 0.0
        %418 = vmatpush1.msra.mxu0 %v379
        %419 = vmatprep.subr.mxu0 0.0
        %420 = vmatpush1.msra.mxu0 0.0
        %421 = vmatprep.subr.mxu0 0.0
        %422 = vmatpush1.msra.mxu0 0.0
        %423 = vmatprep.subr.mxu0 0.0
        %424 = vmatpush1.msra.mxu0 0.0
        %425 = vmatprep.subr.mxu0 0.0
        %426 = vmatpush1.msra.mxu0 0.0
        %427 = vmatprep.subr.mxu0 0.0
        %428 = vmatpush1.msra.mxu0 0.0
        %429 = vmatprep.subr.mxu0 0.0
        %430 = vmatpush1.msra.mxu0 0.0
        %431 = vmatprep.subr.mxu0 0.0
        %432 = vmatpush1.msra.mxu0 0.0
        %433 = vmatprep.subr.mxu0 0.0
        %434 = vmatpush1.msra.mxu0 0.0
        %435 = vmatprep.subr.mxu0 0.0
        %436 = vmatpush1.msra.mxu0 0.0
        %437 = vmatprep.subr.mxu0 0.0
        %438 = vmatpush1.msra.mxu0 0.0
        %439 = vmatprep.subr.mxu0 0.0
        %440 = vmatpush1.msra.mxu0 0.0
        %441 = vmatprep.subr.mxu0 0.0
        %442 = vmatpush1.msra.mxu0 0.0
        %443 = vmatprep.subr.mxu0 0.0
        %444 = vmatpush1.msra.mxu0 0.0
        %445 = vmatprep.subr.mxu0 0.0
        %446 = vmatpush1.msra.mxu0 0.0
        %447 = vmatprep.subr.mxu0 0.0
        %448 = vmatpush1.msra.mxu0 0.0
        %449 = vmatprep.subr.mxu0 0.0
        %450 = vmatpush1.msra.mxu0 0.0
        %451 = vmatprep.mubr.f32.mxu0 0.0
        %452 = vmatmul.mubr.f32.gmra.mrb[0].mxu0 %v363
        %v453 = vpop.f32.mrb[0].mxu0
        %v454 = vadd.f32 %v385, %v453
        %v455 = vpop.f32.mrb[0].mxu0
        %456 = vdwg.mxu0
        %457 = vst [vmem:[%s268] sm:$0xff] %v454
        %s458 = sand.u32 %s141, 1
        %s459 = scalar_lea.sflag [#allocation4], %s458
        %s460 = sand.u32 %s141, 1
        %s461 = smul.addr %s460, 8
        %s462 = scalar_lea.vmem [#allocation8], %s461
        // Predicated region
        $region53: #{tpu_custom_call.1} parent=39 // pred_check
          %p463 = pneg %p151
        $region54: #{tpu_custom_call.1} parent=39 // pred_check_branch
          %465 = sbr.rel (%p463) target = $region56
        $region55: #{tpu_custom_call.1} parent=39 // pred_region
          %s467 = ssub.s32 128, 128
          %468 = vsyncadd %s459, %s467
          %s469 = smul.addr %s23, 128
          %s470 = scalar_lea.hbm %s5, %s469
          %s472 = sshll.u32 %s462, 4
          %s473 = int_to_ptr.vmem [resolvable:$true] %s472
          %475 = dma.vmem_to_hbm [thread:$0]  %s473, 128, %s470, %s459
        $region56: #{tpu_custom_call.1} parent=39 // pred_fallthru
          _
      $region40: #{tpu_custom_call.1} parent=5 // pred_fallthru
        _
      %p476 = scmp.le.s32.totalorder 2, %s18
      // Predicated region
      $region57: #{tpu_custom_call.1} parent=5 // pred_check
        %p477 = pneg %p476
      $region58: #{tpu_custom_call.1} parent=5 // pred_check_branch
        %479 = sbr.rel (%p477) target = $region60
      $region59: #{tpu_custom_call.1} parent=5 // pred_region
        %s480 = ssub.s32 %s18, 2
        // Predicated region
        $region61: #{tpu_custom_call.1} parent=59 // pred_check
          %p481 = pneg %p157
        $region62: #{tpu_custom_call.1} parent=59 // pred_check_branch
          %483 = sbr.rel (%p481) target = $region64
        $region63: #{tpu_custom_call.1} parent=59 // pred_region
          %s484 = sand.u32 %s142, 1
          %s485 = scalar_lea.sflag [#allocation4], %s484
          %s486 = sand.u32 %s142, 1
          %s487 = smul.addr %s486, 8
          %s488 = scalar_lea.vmem [#allocation8], %s487
          %489 = dma.done %s485, 128
        $region64: #{tpu_custom_call.1} parent=59 // pred_fallthru
          _
      $region60: #{tpu_custom_call.1} parent=5 // pred_fallthru
        _
    $region6: #{tpu_custom_call.1} parent=1 // loop_footer
      %s22 = sadd.s32 1, %s18
    $region7: #{tpu_custom_call.1} parent=1 // loop_footer_branch
      %17 = sbr.rel target = $region3
    $region8: #{tpu_custom_call.1} parent=1 // loop_exit
      _
    %490 = vsyncpa [#allocation3], 1
    %s491 = scalar_lea.sflag [#allocation3], 1
    %492 = vsyncpa %s491, 1
    %493 = vsyncpa [#allocation6], 1
    %494 = vsyncpa [#allocation4], 1
    %s495 = scalar_lea.sflag [#allocation4], 1
    %496 = vsyncpa %s495, 1

</llo_original>
